<compile_context>
chip_gen: v6e
topology: v6e:2x2x1
jax: 0.10.0
libtpu: 0.0.40
codegen_flags: <defaults>
</compile_context>

<pallas_src>
import jax
import jax.numpy as jnp
from jax.experimental import pallas as pl
from jax.experimental.pallas import tpu as pltpu

C_IN = 8
HID = 32
C_OUT = 1
MAX_TILE_P = 16384  # pixels per grid step (lane axis); sweepable 8192-32768


def _sigmoid(x):
    # EUP-friendly sigmoid: 0.5*(tanh(x/2)+1)  (mathematically identical).
    return 0.5 * (jnp.tanh(0.5 * x) + 1.0)


def _mlp_kernel(x_ref, w1t_ref, b1_ref, w2t_ref, b2_ref, w3t_ref, b3_ref, o_ref):
    # x: (8, TILE_P) f32 in VMEM; weights are bf16, biases f32.
    x = x_ref[...].astype(jnp.bfloat16)
    h = jnp.dot(w1t_ref[...], x, preferred_element_type=jnp.float32) + b1_ref[...]
    h = _sigmoid(h)                                                    # (32, TILE_P) f32
    h = jnp.dot(w2t_ref[...], h.astype(jnp.bfloat16),
                preferred_element_type=jnp.float32) + b2_ref[...]
    h = _sigmoid(h)                                                    # (32, TILE_P) f32
    o = jnp.dot(w3t_ref[...], h.astype(jnp.bfloat16),
                preferred_element_type=jnp.float32) + b3_ref[...]
    o_ref[...] = o.astype(o_ref.dtype)                                 # (1, TILE_P)


def _round_up(x, m):
    return ((x + m - 1) // m) * m


def _pick_tile(n, p):
    """Largest useful pixel tile (128-multiple), with a v7x 2-core balance check."""
    tile = min(MAX_TILE_P, _round_up(p, 128))
    # Ensure >= 2 grid steps when the problem can be split (v7x megacore).
    if n * ((p + tile - 1) // tile) < 2 and p > 128:
        tile = max(128, _round_up((p + 1) // 2, 128))
    return tile


def net_ms2pan_forward(ms, params):
    """ms: (N, 8, H, W) float32 (NCHW).  Returns (N, 1, H, W) float32."""
    w1, b1, w2, b2, w3, b3 = params
    N, C, H, W = ms.shape
    assert C == C_IN
    P = H * W
    tile = _pick_tile(N, P)

    # NCHW -> (N, C, H*W): free reshape, no HBM transpose, no padding copy.
    x = ms.reshape(N, C_IN, P)

    # Transposed bf16 weights / f32 column biases for channels-in-sublanes layout.
    w1t = w1.T.astype(jnp.bfloat16)          # (32, 8)
    w2t = w2.T.astype(jnp.bfloat16)          # (32, 32)
    w3t = w3.T.astype(jnp.bfloat16)          # (1, 32)
    b1c = b1.reshape(HID, 1)
    b2c = b2.reshape(HID, 1)
    b3c = b3.reshape(C_OUT, 1)

    grid = (N, pl.cdiv(P, tile))             # ragged last pixel block is fine
    full = lambda shape: pl.BlockSpec(shape, lambda n, p: (0, 0))

    out = pl.pallas_call(
        _mlp_kernel,
        out_shape=jax.ShapeDtypeStruct((N, C_OUT, P), jnp.float32),
        grid_spec=pltpu.PrefetchScalarGridSpec(
            num_scalar_prefetch=0,
            grid=grid,
            in_specs=[
                # (8, TILE_P) pixel slab: channels on sublanes, pixels on lanes.
                pl.BlockSpec((None, C_IN, tile), lambda n, p: (n, 0, p)),
                full((HID, C_IN)),     # W1^T  (bf16, VMEM-resident)
                full((HID, 1)),        # b1
                full((HID, HID)),      # W2^T
                full((HID, 1)),        # b2
                full((C_OUT, HID)),    # W3^T
                full((C_OUT, 1)),      # b3
            ],
            # (1, TILE_P) output row: lane-dense stores.
            out_specs=pl.BlockSpec((None, C_OUT, tile), lambda n, p: (n, 0, p)),
        ),
        compiler_params=pltpu.CompilerParams(
            dimension_semantics=("parallel", "parallel"),
            vmem_limit_bytes=32 * 1024 * 1024),
    )(x, w1t, b1c, w2t, b2c, w3t, b3c)

    return out.reshape(N, C_OUT, H, W)


def init_params(key):
    """Deterministic parameter init (uniform, like torch.nn.Linear default)."""
    ks = jax.random.split(key, 6)

    def linear(kw, kb, fan_in, fan_out):
        bound = 1.0 / (fan_in ** 0.5)
        w = jax.random.uniform(kw, (fan_in, fan_out), jnp.float32, -bound, bound)
        b = jax.random.uniform(kb, (fan_out,), jnp.float32, -bound, bound)
        return w, b

    w1, b1 = linear(ks[0], ks[1], C_IN, HID)
    w2, b2 = linear(ks[2], ks[3], HID, HID)
    w3, b3 = linear(ks[4], ks[5], HID, C_OUT)
    return (w1, b1, w2, b2, w3, b3)


def _reference(ms, params):
    """Pure-JAX f32 reference of the PyTorch forward."""
    w1, b1, w2, b2, w3, b3 = params
    x = jnp.transpose(ms, (0, 2, 3, 1))  # NHWC
    h = jax.nn.sigmoid(x @ w1 + b1)
    h = jax.nn.sigmoid(h @ w2 + b2)
    o = h @ w3 + b3
    return jnp.transpose(o, (0, 3, 1, 2))


if __name__ == "__main__":
    key = jax.random.PRNGKey(0)
    kp, kx = jax.random.split(key)
    params = init_params(kp)

    # ms: batch=2, 8 input channels (Linear(8, ...)), 16x16 spatial.
    ms = jax.random.normal(kx, (2, C_IN, 16, 16), jnp.float32)

    out = net_ms2pan_forward(ms, params)
    out = jax.block_until_ready(out)

    ref = _reference(ms, params)
    assert out.shape == (2, 1, 16, 16), out.shape
    # bf16 matmul operands (f32 accumulation): relaxed tolerance vs f32 reference.
    assert jnp.allclose(out, ref, atol=3e-2, rtol=0.0), (
        "mismatch vs reference, max abs err = %f"
        % float(jnp.max(jnp.abs(out - ref))))

    print("KERNEL_OK")
</pallas_src>

<mosaic_0001>
module attributes {stable_mosaic.version = 11 : i64} {
  func.func @_mlp_kernel(%arg0: i32, %arg1: i32, %arg2: memref<1x8x256xf32, #tpu.memory_space<vmem>>, %arg3: memref<32x8xbf16, #tpu.memory_space<vmem>>, %arg4: memref<32x1xf32, #tpu.memory_space<vmem>>, %arg5: memref<32x32xbf16, #tpu.memory_space<vmem>>, %arg6: memref<32x1xf32, #tpu.memory_space<vmem>>, %arg7: memref<1x32xbf16, #tpu.memory_space<vmem>>, %arg8: memref<1x1xf32, #tpu.memory_space<vmem>>, %arg9: memref<1x1x256xf32, #tpu.memory_space<vmem>>) attributes {dimension_semantics = [#tpu.dimension_semantics<parallel>, #tpu.dimension_semantics<parallel>], iteration_bounds = array<i64: 2, 1>, scalar_prefetch = 0 : i64, scratch_operands = 0 : i64, tpu.core_type = #tpu.core_type<tc>, window_params = [{transform_indices = @transform_0, window_bounds = array<i64: 1, 8, 256>}, {pipeline_mode = #tpu.pipeline_mode<synchronous>, transform_indices = @transform_1, window_bounds = array<i64: 32, 8>}, {pipeline_mode = #tpu.pipeline_mode<synchronous>, transform_indices = @transform_2, window_bounds = array<i64: 32, 1>}, {pipeline_mode = #tpu.pipeline_mode<synchronous>, transform_indices = @transform_3, window_bounds = array<i64: 32, 32>}, {pipeline_mode = #tpu.pipeline_mode<synchronous>, transform_indices = @transform_4, window_bounds = array<i64: 32, 1>}, {pipeline_mode = #tpu.pipeline_mode<synchronous>, transform_indices = @transform_5, window_bounds = array<i64: 1, 32>}, {pipeline_mode = #tpu.pipeline_mode<synchronous>, transform_indices = @transform_6, window_bounds = array<i64: 1, 1>}, {transform_indices = @transform_7, window_bounds = array<i64: 1, 1, 256>}]} {
    %c0 = arith.constant 0 : index
    %c0_0 = arith.constant 0 : index
    %c0_1 = arith.constant 0 : index
    %0 = vector.load %arg2[%c0, %c0_0, %c0_1] : memref<1x8x256xf32, #tpu.memory_space<vmem>>, vector<1x8x256xf32>
    %1 = vector.shape_cast %0 : vector<1x8x256xf32> to vector<8x256xf32>
    %2 = arith.truncf %1 : vector<8x256xf32> to vector<8x256xbf16>
    %c0_2 = arith.constant 0 : index
    %c0_3 = arith.constant 0 : index
    %3 = vector.load %arg3[%c0_2, %c0_3] : memref<32x8xbf16, #tpu.memory_space<vmem>>, vector<32x8xbf16>
    %cst = arith.constant dense<0.000000e+00> : vector<32x256xf32>
    %4 = tpu.matmul %3, %2, %cst {dimension_numbers = #tpu.dot_dimension_numbers<[1], [0], [0], [1], [0, 0, 1, 1], [], []>} : vector<32x8xbf16>, vector<8x256xbf16>, vector<32x256xf32> -> vector<32x256xf32>
    %c0_4 = arith.constant 0 : index
    %c0_5 = arith.constant 0 : index
    %5 = vector.load %arg4[%c0_4, %c0_5] : memref<32x1xf32, #tpu.memory_space<vmem>>, vector<32x1xf32>
    %6 = vector.broadcast %5 : vector<32x1xf32> to vector<32x256xf32>
    %7 = arith.addf %4, %6 : vector<32x256xf32>
    %cst_6 = arith.constant 5.000000e-01 : f32
    %8 = vector.broadcast %cst_6 : f32 to vector<32x256xf32>
    %9 = arith.mulf %8, %7 : vector<32x256xf32>
    %10 = math.tanh %9 : vector<32x256xf32>
    %cst_7 = arith.constant 1.000000e+00 : f32
    %11 = vector.broadcast %cst_7 : f32 to vector<32x256xf32>
    %12 = arith.addf %10, %11 : vector<32x256xf32>
    %cst_8 = arith.constant 5.000000e-01 : f32
    %13 = vector.broadcast %cst_8 : f32 to vector<32x256xf32>
    %14 = arith.mulf %13, %12 : vector<32x256xf32>
    %c0_9 = arith.constant 0 : index
    %c0_10 = arith.constant 0 : index
    %15 = vector.load %arg5[%c0_9, %c0_10] : memref<32x32xbf16, #tpu.memory_space<vmem>>, vector<32x32xbf16>
    %16 = arith.truncf %14 : vector<32x256xf32> to vector<32x256xbf16>
    %cst_11 = arith.constant dense<0.000000e+00> : vector<32x256xf32>
    %17 = tpu.matmul %15, %16, %cst_11 {dimension_numbers = #tpu.dot_dimension_numbers<[1], [0], [0], [1], [0, 0, 1, 1], [], []>} : vector<32x32xbf16>, vector<32x256xbf16>, vector<32x256xf32> -> vector<32x256xf32>
    %c0_12 = arith.constant 0 : index
    %c0_13 = arith.constant 0 : index
    %18 = vector.load %arg6[%c0_12, %c0_13] : memref<32x1xf32, #tpu.memory_space<vmem>>, vector<32x1xf32>
    %19 = vector.broadcast %18 : vector<32x1xf32> to vector<32x256xf32>
    %20 = arith.addf %17, %19 : vector<32x256xf32>
    %cst_14 = arith.constant 5.000000e-01 : f32
    %21 = vector.broadcast %cst_14 : f32 to vector<32x256xf32>
    %22 = arith.mulf %21, %20 : vector<32x256xf32>
    %23 = math.tanh %22 : vector<32x256xf32>
    %cst_15 = arith.constant 1.000000e+00 : f32
    %24 = vector.broadcast %cst_15 : f32 to vector<32x256xf32>
    %25 = arith.addf %23, %24 : vector<32x256xf32>
    %cst_16 = arith.constant 5.000000e-01 : f32
    %26 = vector.broadcast %cst_16 : f32 to vector<32x256xf32>
    %27 = arith.mulf %26, %25 : vector<32x256xf32>
    %c0_17 = arith.constant 0 : index
    %c0_18 = arith.constant 0 : index
    %28 = vector.load %arg7[%c0_17, %c0_18] : memref<1x32xbf16, #tpu.memory_space<vmem>>, vector<1x32xbf16>
    %29 = arith.truncf %27 : vector<32x256xf32> to vector<32x256xbf16>
    %cst_19 = arith.constant dense<0.000000e+00> : vector<1x256xf32>
    %30 = tpu.matmul %28, %29, %cst_19 {dimension_numbers = #tpu.dot_dimension_numbers<[1], [0], [0], [1], [0, 0, 1, 1], [], []>} : vector<1x32xbf16>, vector<32x256xbf16>, vector<1x256xf32> -> vector<1x256xf32>
    %c0_20 = arith.constant 0 : index
    %c0_21 = arith.constant 0 : index
    %31 = vector.load %arg8[%c0_20, %c0_21] : memref<1x1xf32, #tpu.memory_space<vmem>>, vector<1x1xf32>
    %32 = vector.broadcast %31 : vector<1x1xf32> to vector<1x256xf32>
    %33 = arith.addf %30, %32 : vector<1x256xf32>
    %c0_22 = arith.constant 0 : index
    %c0_23 = arith.constant 0 : index
    %c0_24 = arith.constant 0 : index
    %34 = vector.load %arg9[%c0_22, %c0_23, %c0_24] : memref<1x1x256xf32, #tpu.memory_space<vmem>>, vector<1x1x256xf32>
    %35 = vector.shape_cast %34 : vector<1x1x256xf32> to vector<1x256xf32>
    %36 = vector.shape_cast %33 : vector<1x256xf32> to vector<1x1x256xf32>
    tpu.vector_store %arg9[%c0_22, %c0_23, %c0_24], %36 {strides = array<i32>} : memref<1x1x256xf32, #tpu.memory_space<vmem>>, vector<1x1x256xf32>,
    return
  }
  func.func @transform_0(%arg0: i32, %arg1: i32) -> (i32, i32, i32) {
    %c0_i32 = arith.constant 0 : i32
    %c0_i32_0 = arith.constant 0 : i32
    return %arg0, %c0_i32, %arg1 : i32, i32, i32
  }
  func.func @transform_1(%arg0: i32, %arg1: i32) -> (i32, i32) {
    %c0_i32 = arith.constant 0 : i32
    %c0_i32_0 = arith.constant 0 : i32
    %c0_i32_1 = arith.constant 0 : i32
    return %c0_i32, %c0_i32_0 : i32, i32
  }
  func.func @transform_2(%arg0: i32, %arg1: i32) -> (i32, i32) {
    %c0_i32 = arith.constant 0 : i32
    %c0_i32_0 = arith.constant 0 : i32
    %c0_i32_1 = arith.constant 0 : i32
    return %c0_i32, %c0_i32_0 : i32, i32
  }
  func.func @transform_3(%arg0: i32, %arg1: i32) -> (i32, i32) {
    %c0_i32 = arith.constant 0 : i32
    %c0_i32_0 = arith.constant 0 : i32
    %c0_i32_1 = arith.constant 0 : i32
    return %c0_i32, %c0_i32_0 : i32, i32
  }
  func.func @transform_4(%arg0: i32, %arg1: i32) -> (i32, i32) {
    %c0_i32 = arith.constant 0 : i32
    %c0_i32_0 = arith.constant 0 : i32
    %c0_i32_1 = arith.constant 0 : i32
    return %c0_i32, %c0_i32_0 : i32, i32
  }
  func.func @transform_5(%arg0: i32, %arg1: i32) -> (i32, i32) {
    %c0_i32 = arith.constant 0 : i32
    %c0_i32_0 = arith.constant 0 : i32
    %c0_i32_1 = arith.constant 0 : i32
    return %c0_i32, %c0_i32_0 : i32, i32
  }
  func.func @transform_6(%arg0: i32, %arg1: i32) -> (i32, i32) {
    %c0_i32 = arith.constant 0 : i32
    %c0_i32_0 = arith.constant 0 : i32
    %c0_i32_1 = arith.constant 0 : i32
    return %c0_i32, %c0_i32_0 : i32, i32
  }
  func.func @transform_7(%arg0: i32, %arg1: i32) -> (i32, i32, i32) {
    %c0_i32 = arith.constant 0 : i32
    %c0_i32_0 = arith.constant 0 : i32
    return %arg0, %c0_i32, %arg1 : i32, i32, i32
  }
}

</mosaic_0001>

<llo_original>
// kernel: tpu_custom_call.1
$region0: #{tpu_custom_call.1}
  #allocation0 [shape = 'u32[]', space=smem, size = 0x4, offset = 0x4, fixed_abs, tag = 'smem constant byte address 0x4 - core index']
  #allocation1 [shape = 'u32[144,128]{1,0:T(1,128)}', space=vmem, size = 0x12000, scoped, tag = 'internal scratch']
  #allocation2 [shape = 'f32[1,1]{1,0:T(1,128)S(1)}', space=vmem, size = 0x200, scoped, tag = 'scoped memory for tpu_custom_call.1']
  %s0 = inlined_call_operand.vmem [shape: f32[2,8,256], index: 0, kind: input, shape index: {}]
  %s1 = inlined_call_operand.vmem [shape: bf16[32,8], index: 1, kind: input, shape index: {}]
  %s2 = inlined_call_operand.vmem [shape: f32[32,1], index: 2, kind: input, shape index: {}]
  %s3 = inlined_call_operand.vmem [shape: bf16[32,32], index: 3, kind: input, shape index: {}]
  %s4 = inlined_call_operand.vmem [shape: f32[32,1], index: 4, kind: input, shape index: {}]
  %s5 = inlined_call_operand.vmem [shape: bf16[1,32], index: 5, kind: input, shape index: {}]
  %s6 = inlined_call_operand.<no memory space> [shape: f32[1,1], index: 6, kind: input, shape index: {}]
  %s7 = inlined_call_operand.hbm [shape: f32[2,1,256], index: 7, kind: output, shape index: {}]
  %s8 = sld [smem:[#allocation0]]
  $region61: #{tpu_custom_call.1} parent=0
    _
  %s10 = ssub.s32 1, %s8
  %s11 = scalar_select 0, %s10, %s8
  %v12 = vstv %s6
  %13 = vst [vmem:[#allocation2] sm:$0x1] %v12
  $region1: #{tpu_custom_call.1} parent=0
    #allocation3 [shape = 'u8[2048]{0}', space=vmem, size = 0x800, scoped, tag = 'output window, operand 0']
    #allocation4 [shape = 's32[2]{0}', space=sflag, size = 0x8, scoped, tag = 'scoped memory for tpu_custom_call.1']
    %14 = vsyncpa [#allocation4], 0
    %s15 = scalar_lea.sflag [#allocation4], 1
    %16 = vsyncpa %s15, 0
    loop: start=0, step=1, limit=4
    $region2: #{tpu_custom_call.1} parent=1 // loop_pre_header
      _
    $region3: #{tpu_custom_call.1} parent=1 // loop_header
      %s18 = sphi 0, %s22
      %p19 = scmp.ge.s32.totalorder %s18, 4
      %s25 = sphi 0, %s37
      %s26 = sphi 0, %s33
      %s27 = sphi 0, %s25
      %s28 = sphi 0, %s26
      %s29 = sphi 0, %s27
      %s30 = sphi 0, %s28
      %s42 = sphi 0, %s44
      %s45 = sphi 0, %s42
      %s46 = sphi 0, %s45
      %s62 = sphi 0, %s46
      %s66 = sphi 0, %s66
      %s68 = sphi 0, %s66
      %s69 = sphi 0, %s68
      %s83 = sphi 0, %s69
      %s87 = sphi 0, %s87
      %s89 = sphi 0, %s87
      %s90 = sphi 0, %s89
      %s104 = sphi 0, %s90
      %s108 = sphi 0, %s108
      %s110 = sphi 0, %s108
      %s111 = sphi 0, %s110
      %s125 = sphi 0, %s111
      %s129 = sphi 0, %s129
      %s131 = sphi 0, %s129
      %s132 = sphi 0, %s131
      %s146 = sphi 0, %s132
      %s150 = sphi 0, %s150
      %s152 = sphi 0, %s150
      %s153 = sphi 0, %s152
      %s167 = sphi 0, %s153
      %s171 = sphi 0, %s171
      %s173 = sphi 0, %s171
      %s174 = sphi 0, %s173
      %s188 = sphi 0, %s174
      %s196 = sphi 0, %s198
      %s199 = sphi 0, %s196
      %s200 = sphi 0, %s199
      %s216 = sphi 0, %s200
    $region4: #{tpu_custom_call.1} parent=1 // loop_header_branch
      %21 = sbr.rel (%p19) target = $region8
    $region5: #{tpu_custom_call.1} parent=1 // loop_body
      %s23 = ssub.s32 %s18, 1
      %s24 = ssub.s32 %s18, 2
      %s31 = sadd.s32 1, %s26
      %p32 = scmp.ge.s32.totalorder %s31, 1
      %s33 = scalar_select %p32, 0, %s31
      %s34 = sadd.s32 1, %s25
      %s35 = scalar_select %p32, %s34, %s25
      %p36 = scmp.ge.s32.totalorder %s35, 2
      %s37 = scalar_select %p36, 0, %s35
      %s38 = ssub.s32 %s25, %s37
      %s39 = ssub.s32 %s26, %s33
      %s40 = sor.u32 %s38, %s39
      %p41 = scmp.eq.s32.totalorder %s40, 0
      %s43 = sadd.s32 %s42, 1
      %s44 = scalar_select %p41, %s42, %s43
      %p47 = pneg %p41
      %p48 = scmp.eq.s32.totalorder %s18, 1
      %p49 = por %p47, %p48
      %p50 = scmp.ne.s32.totalorder %s42, %s45
      %p51 = scmp.eq.s32.totalorder %s18, 0
      %p52 = por %p50, %p51
      %p53 = scmp.ne.s32.totalorder %s42, %s45
      %p54 = scmp.eq.s32.totalorder %s23, 1
      %p55 = por %p53, %p54
      %p56 = scmp.ne.s32.totalorder %s45, %s46
      %p57 = scmp.eq.s32.totalorder %s23, 0
      %p58 = por %p56, %p57
      %p59 = scmp.ne.s32.totalorder %s45, %s46
      %p60 = scmp.eq.s32.totalorder %s24, 1
      %p61 = por %p59, %p60
      %p63 = scmp.ne.s32.totalorder %s46, %s62
      %p64 = scmp.eq.s32.totalorder %s24, 0
      %p65 = por %p63, %p64
      %s67 = sadd.s32 %s66, 1
      %p70 = scmp.eq.s32.totalorder %s18, 1
      %p71 = scmp.ne.s32.totalorder %s66, %s68
      %p72 = scmp.eq.s32.totalorder %s18, 0
      %p73 = por %p71, %p72
      %p74 = scmp.ne.s32.totalorder %s66, %s68
      %p75 = scmp.eq.s32.totalorder %s23, 1
      %p76 = por %p74, %p75
      %p77 = scmp.ne.s32.totalorder %s68, %s69
      %p78 = scmp.eq.s32.totalorder %s23, 0
      %p79 = por %p77, %p78
      %p80 = scmp.ne.s32.totalorder %s68, %s69
      %p81 = scmp.eq.s32.totalorder %s24, 1
      %p82 = por %p80, %p81
      %p84 = scmp.ne.s32.totalorder %s69, %s83
      %p85 = scmp.eq.s32.totalorder %s24, 0
      %p86 = por %p84, %p85
      %s88 = sadd.s32 %s87, 1
      %p91 = scmp.eq.s32.totalorder %s18, 1
      %p92 = scmp.ne.s32.totalorder %s87, %s89
      %p93 = scmp.eq.s32.totalorder %s18, 0
      %p94 = por %p92, %p93
      %p95 = scmp.ne.s32.totalorder %s87, %s89
      %p96 = scmp.eq.s32.totalorder %s23, 1
      %p97 = por %p95, %p96
      %p98 = scmp.ne.s32.totalorder %s89, %s90
      %p99 = scmp.eq.s32.totalorder %s23, 0
      %p100 = por %p98, %p99
      %p101 = scmp.ne.s32.totalorder %s89, %s90
      %p102 = scmp.eq.s32.totalorder %s24, 1
      %p103 = por %p101, %p102
      %p105 = scmp.ne.s32.totalorder %s90, %s104
      %p106 = scmp.eq.s32.totalorder %s24, 0
      %p107 = por %p105, %p106
      %s109 = sadd.s32 %s108, 1
      %p112 = scmp.eq.s32.totalorder %s18, 1
      %p113 = scmp.ne.s32.totalorder %s108, %s110
      %p114 = scmp.eq.s32.totalorder %s18, 0
      %p115 = por %p113, %p114
      %p116 = scmp.ne.s32.totalorder %s108, %s110
      %p117 = scmp.eq.s32.totalorder %s23, 1
      %p118 = por %p116, %p117
      %p119 = scmp.ne.s32.totalorder %s110, %s111
      %p120 = scmp.eq.s32.totalorder %s23, 0
      %p121 = por %p119, %p120
      %p122 = scmp.ne.s32.totalorder %s110, %s111
      %p123 = scmp.eq.s32.totalorder %s24, 1
      %p124 = por %p122, %p123
      %p126 = scmp.ne.s32.totalorder %s111, %s125
      %p127 = scmp.eq.s32.totalorder %s24, 0
      %p128 = por %p126, %p127
      %s130 = sadd.s32 %s129, 1
      %p133 = scmp.eq.s32.totalorder %s18, 1
      %p134 = scmp.ne.s32.totalorder %s129, %s131
      %p135 = scmp.eq.s32.totalorder %s18, 0
      %p136 = por %p134, %p135
      %p137 = scmp.ne.s32.totalorder %s129, %s131
      %p138 = scmp.eq.s32.totalorder %s23, 1
      %p139 = por %p137, %p138
      %p140 = scmp.ne.s32.totalorder %s131, %s132
      %p141 = scmp.eq.s32.totalorder %s23, 0
      %p142 = por %p140, %p141
      %p143 = scmp.ne.s32.totalorder %s131, %s132
      %p144 = scmp.eq.s32.totalorder %s24, 1
      %p145 = por %p143, %p144
      %p147 = scmp.ne.s32.totalorder %s132, %s146
      %p148 = scmp.eq.s32.totalorder %s24, 0
      %p149 = por %p147, %p148
      %s151 = sadd.s32 %s150, 1
      %p154 = scmp.eq.s32.totalorder %s18, 1
      %p155 = scmp.ne.s32.totalorder %s150, %s152
      %p156 = scmp.eq.s32.totalorder %s18, 0
      %p157 = por %p155, %p156
      %p158 = scmp.ne.s32.totalorder %s150, %s152
      %p159 = scmp.eq.s32.totalorder %s23, 1
      %p160 = por %p158, %p159
      %p161 = scmp.ne.s32.totalorder %s152, %s153
      %p162 = scmp.eq.s32.totalorder %s23, 0
      %p163 = por %p161, %p162
      %p164 = scmp.ne.s32.totalorder %s152, %s153
      %p165 = scmp.eq.s32.totalorder %s24, 1
      %p166 = por %p164, %p165
      %p168 = scmp.ne.s32.totalorder %s153, %s167
      %p169 = scmp.eq.s32.totalorder %s24, 0
      %p170 = por %p168, %p169
      %s172 = sadd.s32 %s171, 1
      %p175 = scmp.eq.s32.totalorder %s18, 1
      %p176 = scmp.ne.s32.totalorder %s171, %s173
      %p177 = scmp.eq.s32.totalorder %s18, 0
      %p178 = por %p176, %p177
      %p179 = scmp.ne.s32.totalorder %s171, %s173
      %p180 = scmp.eq.s32.totalorder %s23, 1
      %p181 = por %p179, %p180
      %p182 = scmp.ne.s32.totalorder %s173, %s174
      %p183 = scmp.eq.s32.totalorder %s23, 0
      %p184 = por %p182, %p183
      %p185 = scmp.ne.s32.totalorder %s173, %s174
      %p186 = scmp.eq.s32.totalorder %s24, 1
      %p187 = por %p185, %p186
      %p189 = scmp.ne.s32.totalorder %s174, %s188
      %p190 = scmp.eq.s32.totalorder %s24, 0
      %p191 = por %p189, %p190
      %s192 = ssub.s32 %s25, %s37
      %s193 = ssub.s32 %s26, %s33
      %s194 = sor.u32 %s192, %s193
      %p195 = scmp.eq.s32.totalorder %s194, 0
      %s197 = sadd.s32 %s196, 1
      %s198 = scalar_select %p195, %s196, %s197
      %p201 = pneg %p195
      %p202 = scmp.eq.s32.totalorder %s18, 1
      %p203 = por %p201, %p202
      %p204 = scmp.ne.s32.totalorder %s196, %s199
      %p205 = scmp.eq.s32.totalorder %s18, 0
      %p206 = por %p204, %p205
      %p207 = scmp.ne.s32.totalorder %s196, %s199
      %p208 = scmp.eq.s32.totalorder %s23, 1
      %p209 = por %p207, %p208
      %p210 = scmp.ne.s32.totalorder %s199, %s200
      %p211 = scmp.eq.s32.totalorder %s23, 0
      %p212 = por %p210, %p211
      %p213 = scmp.ne.s32.totalorder %s199, %s200
      %p214 = scmp.eq.s32.totalorder %s24, 1
      %p215 = por %p213, %p214
      %p217 = scmp.ne.s32.totalorder %s200, %s216
      %p218 = scmp.eq.s32.totalorder %s24, 0
      %p219 = por %p217, %p218
      %p220 = scmp.le.s32.totalorder 1, %s18
      %p221 = scmp.lt.s32.totalorder %s18, 3
      %p222 = pnand %p220, %p221
      %p223 = pneg %p222
      // Predicated region
      $region9: #{tpu_custom_call.1} parent=5 // pred_check
        _
      $region10: #{tpu_custom_call.1} parent=5 // pred_check_branch
        %225 = sbr.rel (%p222) target = $region12
      $region11: #{tpu_custom_call.1} parent=5 // pred_region
        %s226 = ssub.s32 %s18, 1
        // Predicated region
        $region13: #{tpu_custom_call.1} parent=11 // pred_check
          %p227 = pneg %p79
        $region14: #{tpu_custom_call.1} parent=11 // pred_check_branch
          %229 = sbr.rel (%p227) target = $region16
        $region15: #{tpu_custom_call.1} parent=11 // pred_region
          _
        $region16: #{tpu_custom_call.1} parent=11 // pred_fallthru
          _
        // Predicated region
        $region17: #{tpu_custom_call.1} parent=11 // pred_check
          %p230 = pneg %p100
        $region18: #{tpu_custom_call.1} parent=11 // pred_check_branch
          %232 = sbr.rel (%p230) target = $region20
        $region19: #{tpu_custom_call.1} parent=11 // pred_region
          _
        $region20: #{tpu_custom_call.1} parent=11 // pred_fallthru
          _
        // Predicated region
        $region21: #{tpu_custom_call.1} parent=11 // pred_check
          %p233 = pneg %p121
        $region22: #{tpu_custom_call.1} parent=11 // pred_check_branch
          %235 = sbr.rel (%p233) target = $region24
        $region23: #{tpu_custom_call.1} parent=11 // pred_region
          _
        $region24: #{tpu_custom_call.1} parent=11 // pred_fallthru
          _
        // Predicated region
        $region25: #{tpu_custom_call.1} parent=11 // pred_check
          %p236 = pneg %p142
        $region26: #{tpu_custom_call.1} parent=11 // pred_check_branch
          %238 = sbr.rel (%p236) target = $region28
        $region27: #{tpu_custom_call.1} parent=11 // pred_region
          _
        $region28: #{tpu_custom_call.1} parent=11 // pred_fallthru
          _
        // Predicated region
        $region29: #{tpu_custom_call.1} parent=11 // pred_check
          %p239 = pneg %p163
        $region30: #{tpu_custom_call.1} parent=11 // pred_check_branch
          %241 = sbr.rel (%p239) target = $region32
        $region31: #{tpu_custom_call.1} parent=11 // pred_region
          _
        $region32: #{tpu_custom_call.1} parent=11 // pred_fallthru
          _
        // Predicated region
        $region33: #{tpu_custom_call.1} parent=11 // pred_check
          %p242 = pneg %p184
        $region34: #{tpu_custom_call.1} parent=11 // pred_check_branch
          %244 = sbr.rel (%p242) target = $region36
        $region35: #{tpu_custom_call.1} parent=11 // pred_region
          _
        $region36: #{tpu_custom_call.1} parent=11 // pred_fallthru
          _
      $region12: #{tpu_custom_call.1} parent=5 // pred_fallthru
        _
      %p245 = scmp.lt.s32.totalorder %s18, 2
      // Predicated region
      $region37: #{tpu_custom_call.1} parent=5 // pred_check
        %p246 = pneg %p245
      $region38: #{tpu_custom_call.1} parent=5 // pred_check_branch
        %248 = sbr.rel (%p246) target = $region40
      $region39: #{tpu_custom_call.1} parent=5 // pred_region
        // Predicated region
        $region41: #{tpu_custom_call.1} parent=39 // pred_check
          %p249 = pneg %p52
        $region42: #{tpu_custom_call.1} parent=39 // pred_check_branch
          %251 = sbr.rel (%p249) target = $region44
        $region43: #{tpu_custom_call.1} parent=39 // pred_region
          %s252 = smul.u32 2, %s26
          %p253 = scmp.lt.s32.totalorder %s25, 1
          %s254 = scalar_select %p253, %s25, 1
          %p255 = scmp.lt.s32.totalorder %s252, 1
          %s256 = scalar_select %p255, %s252, 1
          %s257 = smul.addr %s254, 2
          %s258 = sadd.s32 %s256, %s257
          %s259 = smul.addr %s258, 8
          %s260 = scalar_lea.vmem %s0, %s259
          %s261 = smul.u32 2, %s26
        $region44: #{tpu_custom_call.1} parent=39 // pred_fallthru
          _
      $region40: #{tpu_custom_call.1} parent=5 // pred_fallthru
        _
      %p262 = scmp.le.s32.totalorder 1, %s18
      %p263 = scmp.lt.s32.totalorder %s18, 3
      %p264 = pnand %p262, %p263
      %p265 = pneg %p264
      // Predicated region
      $region45: #{tpu_custom_call.1} parent=5 // pred_check
        _
      $region46: #{tpu_custom_call.1} parent=5 // pred_check_branch
        %267 = sbr.rel (%p264) target = $region48
      $region47: #{tpu_custom_call.1} parent=5 // pred_region
        %s268 = ssub.s32 %s18, 1
        %s269 = smul.u32 2, %s28
        %p270 = scmp.lt.s32.totalorder %s27, 1
        %s271 = scalar_select %p270, %s27, 1
        %p272 = scmp.lt.s32.totalorder %s269, 1
        %s273 = scalar_select %p272, %s269, 1
        %s274 = smul.addr %s271, 2
        %s275 = sadd.s32 %s273, %s274
        %s276 = smul.addr %s275, 8
        %s277 = scalar_lea.vmem %s0, %s276
        %p278 = pneg %p58
        %p279 = pneg %p55
        %p280 = pneg %p79
        %p281 = pneg %p76
        %p282 = pneg %p100
        %p283 = pneg %p97
        %p284 = pneg %p121
        %p285 = pneg %p118
        %p286 = pneg %p142
        %p287 = pneg %p139
        %p288 = pneg %p163
        %p289 = pneg %p160
        %p290 = pneg %p184
        %p291 = pneg %p181
        %p292 = pneg %p212
        %p293 = pneg %p209
        %s294 = sand.u32 %s199, 1
        %s295 = scalar_lea.sflag [#allocation4], %s294
        %s296 = sand.u32 %s199, 1
        %s297 = smul.addr %s296, 2
        %s298 = scalar_lea.vmem [#allocation3], %s297
        %s299 = smul.u32 2, %s28
        %p300 = scmp.lt.s32.totalorder %s27, 1
        %s301 = scalar_select %p300, %s27, 1
        %p302 = scmp.lt.s32.totalorder %s299, 1
        %s303 = scalar_select %p302, %s299, 1
        %s304 = smul.addr %s301, 2
        %s305 = sadd.s32 %s303, %s304
        %s306 = smul.addr %s305, 8
        %s307 = scalar_lea.vmem %s0, %s306
        %s308 = smul.u32 2, %s28
        %s309 = smul.u32 2, %s28
        %v311 = vld [vmem:[%s307] sm:$0xff]
        %v312 = vld [vmem:[%s307 + $0x8] sm:$0xff]
        %v313 = vpack.c.bf16 %v311, %v311
        %v314 = vpack.c.bf16 %v312, %v312
        %v315 = vld [vmem:[%s1] sm:$0xf]
        %v316 = vld [vmem:[%s1 + $0x4] sm:$0xf]
        %v317 = vld [vmem:[%s1 + $0x8] sm:$0xf]
        %v318 = vld [vmem:[%s1 + $0xc] sm:$0xf]
        %v319 = vld [vmem:[%s2] sm:$0xff]
        %v320 = vld [vmem:[%s2 + $0x8] sm:$0xff]
        %v321 = vld [vmem:[%s2 + $0x10] sm:$0xff]
        %v322 = vld [vmem:[%s2 + $0x18] sm:$0xff]
        %324 = vset.pattern.permute.xlu0 0
        %325 = vperm.xlu0 %324, %v319
        %v326 = vpop.permute.xlu0 %325
        %329 = vset.pattern.permute.xlu0 0
        %330 = vperm.xlu0 %329, %v320
        %v331 = vpop.permute.xlu0 %330
        %334 = vset.pattern.permute.xlu0 0
        %335 = vperm.xlu0 %334, %v321
        %v336 = vpop.permute.xlu0 %335
        %339 = vset.pattern.permute.xlu0 0
        %340 = vperm.xlu0 %339, %v322
        %v341 = vpop.permute.xlu0 %340
        %v347 = vunpack.c.l.b16 %v315
        %v348 = vunpack.c.l.b16 %v316
        %v349 = vunpack.c.l.b16 %v317
        %v350 = vunpack.c.l.b16 %v318
        %v351 = vpack.c.b16 %v348, %v347
        %v352 = vpack.c.b16 %v350, %v349
        %vm353 = vcmask 64512
        %v355 = vsel %vm353, %v351, 0
        %v358 = vsel %vm353, %v352, 0
        %vm360 = vcmask 1043456
        %v362 = vsel %vm360, %v313, 0
        %v365 = vsel %vm360, %v314, 0
        %367 = vmatprep.subr.bf16.mxu0 0
        %368 = vmatpush1.bf16.msra.mxu0 0
        %369 = vmatprep.subr.bf16.mxu0 0
        %370 = vmatpush1.bf16.msra.mxu0 0
        %371 = vmatprep.subr.bf16.mxu0 0
        %372 = vmatpush1.bf16.msra.mxu0 0
        %373 = vmatprep.subr.bf16.mxu0 0
        %374 = vmatpush1.bf16.msra.mxu0 0
        %375 = vmatprep.subr.bf16.mxu0 0
        %376 = vmatpush1.bf16.msra.mxu0 0
        %377 = vmatprep.subr.bf16.mxu0 0
        %378 = vmatpush1.bf16.msra.mxu0 0
        %379 = vmatprep.subr.bf16.mxu0 0
        %380 = vmatpush1.bf16.msra.mxu0 0
        %381 = vmatprep.subr.bf16.mxu0 %v365
        %382 = vmatpush1.bf16.msra.mxu0 %v362
        %383 = vmatprep.subr.bf16.mxu0 0
        %384 = vmatpush2.bf16.msra.mxu0 0
        %385 = vmatprep.subr.bf16.mxu0 0
        %386 = vmatpush2.bf16.msra.mxu0 0
        %387 = vmatprep.subr.bf16.mxu0 0
        %388 = vmatpush2.bf16.msra.mxu0 0
        %389 = vmatprep.subr.bf16.mxu0 0
        %390 = vmatpush2.bf16.msra.mxu0 0
        %391 = vmatprep.subr.bf16.mxu0 0
        %392 = vmatpush2.bf16.msra.mxu0 0
        %393 = vmatprep.subr.bf16.mxu0 0
        %394 = vmatpush2.bf16.msra.mxu0 0
        %395 = vmatprep.subr.bf16.mxu0 0
        %396 = vmatpush2.bf16.msra.mxu0 0
        %397 = vmatprep.subr.bf16.mxu0 0
        %398 = vmatpush2.bf16.msra.mxu0 0
        %399 = vmatprep.mubr.bf16.mxu0 0
        %400 = vmatmul.mubr.bf16.gmra.mxu0 %v355
        %v401 = vpop.f32.mrf.mxu0
        %v402 = vadd.f32 %v326, %v401
        %v403 = vpop.f32.mrf.mxu0
        %v404 = vadd.f32 %v326, %v403
        %v405 = vpop.f32.mrf.mxu0
        %v406 = vadd.f32 %v331, %v405
        %v407 = vpop.f32.mrf.mxu0
        %v408 = vadd.f32 %v331, %v407
        %409 = vmatprep.mubr.bf16.mxu0 0
        %410 = vmatmul.mubr.bf16.gmra.mxu0 %v358
        %v411 = vpop.f32.mrf.mxu0
        %v412 = vadd.f32 %v336, %v411
        %v413 = vpop.f32.mrf.mxu0
        %v414 = vadd.f32 %v336, %v413
        %v415 = vpop.f32.mrf.mxu0
        %v416 = vadd.f32 %v341, %v415
        %v417 = vpop.f32.mrf.mxu0
        %v418 = vadd.f32 %v341, %v417
        %419 = vdwg.mxu0
        %v420 = vmul.f32 %v402, 0.5
        %v421 = vmul.f32 %v404, 0.5
        %v422 = vmul.f32 %v406, 0.5
        %v423 = vmul.f32 %v408, 0.5
        %v424 = vmul.f32 %v412, 0.5
        %v425 = vmul.f32 %v414, 0.5
        %v426 = vmul.f32 %v416, 0.5
        %v427 = vmul.f32 %v418, 0.5
        %v428 = vtanh.pop %v420
        %v429 = vtanh.pop %v421
        %v430 = vtanh.pop %v422
        %v431 = vtanh.pop %v423
        %v432 = vtanh.pop %v424
        %v433 = vtanh.pop %v425
        %v434 = vtanh.pop %v426
        %v435 = vtanh.pop %v427
        %v436 = vadd.f32 %v428, 1.0
        %v437 = vadd.f32 %v429, 1.0
        %v438 = vadd.f32 %v430, 1.0
        %v439 = vadd.f32 %v431, 1.0
        %v440 = vadd.f32 %v432, 1.0
        %v441 = vadd.f32 %v433, 1.0
        %v442 = vadd.f32 %v434, 1.0
        %v443 = vadd.f32 %v435, 1.0
        %v444 = vmul.f32 %v436, 0.5
        %v445 = vmul.f32 %v437, 0.5
        %v446 = vmul.f32 %v438, 0.5
        %v447 = vmul.f32 %v439, 0.5
        %v448 = vmul.f32 %v440, 0.5
        %v449 = vmul.f32 %v441, 0.5
        %v450 = vmul.f32 %v442, 0.5
        %v451 = vmul.f32 %v443, 0.5
        %v452 = vld [vmem:[%s3] sm:$0xf]
        %v453 = vld [vmem:[%s3 + $0x4] sm:$0xf]
        %v454 = vld [vmem:[%s3 + $0x8] sm:$0xf]
        %v455 = vld [vmem:[%s3 + $0xc] sm:$0xf]
        %v456 = vpack.c.bf16 %v446, %v444
        %v457 = vpack.c.bf16 %v447, %v445
        %v458 = vpack.c.bf16 %v450, %v448
        %v459 = vpack.c.bf16 %v451, %v449
        %v460 = vld [vmem:[%s4] sm:$0xff]
        %v461 = vld [vmem:[%s4 + $0x8] sm:$0xff]
        %v462 = vld [vmem:[%s4 + $0x10] sm:$0xff]
        %v463 = vld [vmem:[%s4 + $0x18] sm:$0xff]
        %465 = vset.pattern.permute.xlu0 0
        %466 = vperm.xlu0 %465, %v460
        %v467 = vpop.permute.xlu0 %466
        %470 = vset.pattern.permute.xlu0 0
        %471 = vperm.xlu0 %470, %v461
        %v472 = vpop.permute.xlu0 %471
        %475 = vset.pattern.permute.xlu0 0
        %476 = vperm.xlu0 %475, %v462
        %v477 = vpop.permute.xlu0 %476
        %480 = vset.pattern.permute.xlu0 0
        %481 = vperm.xlu0 %480, %v463
        %v482 = vpop.permute.xlu0 %481
        %v488 = vunpack.c.l.b16 %v452
        %v489 = vunpack.c.l.b16 %v453
        %v490 = vunpack.c.l.b16 %v454
        %v491 = vunpack.c.l.b16 %v455
        %v492 = vpack.c.b16 %v489, %v488
        %v493 = vpack.c.b16 %v491, %v490
        %vm494 = vcmask 261120
        %v496 = vsel %vm494, %v492, 0
        %v499 = vsel %vm494, %v493, 0
        %501 = vmatprep.subr.bf16.mxu0 0
        %502 = vmatpush1.bf16.msra.mxu0 0
        %503 = vmatprep.subr.bf16.mxu0 0
        %504 = vmatpush1.bf16.msra.mxu0 0
        %505 = vmatprep.subr.bf16.mxu0 0
        %506 = vmatpush1.bf16.msra.mxu0 0
        %507 = vmatprep.subr.bf16.mxu0 0
        %508 = vmatpush1.bf16.msra.mxu0 0
        %509 = vmatprep.subr.bf16.mxu0 0
        %510 = vmatpush1.bf16.msra.mxu0 0
        %511 = vmatprep.subr.bf16.mxu0 0
        %512 = vmatpush1.bf16.msra.mxu0 0
        %513 = vmatprep.subr.bf16.mxu0 %v459
        %514 = vmatpush1.bf16.msra.mxu0 %v458
        %515 = vmatprep.subr.bf16.mxu0 %v457
        %516 = vmatpush1.bf16.msra.mxu0 %v456
        %517 = vmatprep.subr.bf16.mxu0 0
        %518 = vmatpush2.bf16.msra.mxu0 0
        %519 = vmatprep.subr.bf16.mxu0 0
        %520 = vmatpush2.bf16.msra.mxu0 0
        %521 = vmatprep.subr.bf16.mxu0 0
        %522 = vmatpush2.bf16.msra.mxu0 0
        %523 = vmatprep.subr.bf16.mxu0 0
        %524 = vmatpush2.bf16.msra.mxu0 0
        %525 = vmatprep.subr.bf16.mxu0 0
        %526 = vmatpush2.bf16.msra.mxu0 0
        %527 = vmatprep.subr.bf16.mxu0 0
        %528 = vmatpush2.bf16.msra.mxu0 0
        %529 = vmatprep.subr.bf16.mxu0 0
        %530 = vmatpush2.bf16.msra.mxu0 0
        %531 = vmatprep.subr.bf16.mxu0 0
        %532 = vmatpush2.bf16.msra.mxu0 0
        %533 = vmatprep.mubr.bf16.mxu0 0
        %534 = vmatmul.mubr.bf16.gmra.mxu0 %v496
        %v535 = vpop.f32.mrf.mxu0
        %v536 = vadd.f32 %v467, %v535
        %v537 = vpop.f32.mrf.mxu0
        %v538 = vadd.f32 %v467, %v537
        %v539 = vpop.f32.mrf.mxu0
        %v540 = vadd.f32 %v472, %v539
        %v541 = vpop.f32.mrf.mxu0
        %v542 = vadd.f32 %v472, %v541
        %543 = vmatprep.mubr.bf16.mxu0 0
        %544 = vmatmul.mubr.bf16.gmra.mxu0 %v499
        %v545 = vpop.f32.mrf.mxu0
        %v546 = vadd.f32 %v477, %v545
        %v547 = vpop.f32.mrf.mxu0
        %v548 = vadd.f32 %v477, %v547
        %v549 = vpop.f32.mrf.mxu0
        %v550 = vadd.f32 %v482, %v549
        %v551 = vpop.f32.mrf.mxu0
        %v552 = vadd.f32 %v482, %v551
        %553 = vdwg.mxu0
        %v554 = vmul.f32 %v536, 0.5
        %v555 = vmul.f32 %v538, 0.5
        %v556 = vmul.f32 %v540, 0.5
        %v557 = vmul.f32 %v542, 0.5
        %v558 = vmul.f32 %v546, 0.5
        %v559 = vmul.f32 %v548, 0.5
        %v560 = vmul.f32 %v550, 0.5
        %v561 = vmul.f32 %v552, 0.5
        %v562 = vtanh.pop %v554
        %v563 = vtanh.pop %v555
        %v564 = vtanh.pop %v556
        %v565 = vtanh.pop %v557
        %v566 = vtanh.pop %v558
        %v567 = vtanh.pop %v559
        %v568 = vtanh.pop %v560
        %v569 = vtanh.pop %v561
        %v570 = vadd.f32 %v562, 1.0
        %v571 = vadd.f32 %v563, 1.0
        %v572 = vadd.f32 %v564, 1.0
        %v573 = vadd.f32 %v565, 1.0
        %v574 = vadd.f32 %v566, 1.0
        %v575 = vadd.f32 %v567, 1.0
        %v576 = vadd.f32 %v568, 1.0
        %v577 = vadd.f32 %v569, 1.0
        %v578 = vmul.f32 %v570, 0.5
        %v579 = vmul.f32 %v571, 0.5
        %v580 = vmul.f32 %v572, 0.5
        %v581 = vmul.f32 %v573, 0.5
        %v582 = vmul.f32 %v574, 0.5
        %v583 = vmul.f32 %v575, 0.5
        %v584 = vmul.f32 %v576, 0.5
        %v585 = vmul.f32 %v577, 0.5
        %v586 = vld [vmem:[%s5] sm:$0x1]
        %v587 = vpack.c.bf16 %v580, %v578
        %v588 = vpack.c.bf16 %v581, %v579
        %v589 = vpack.c.bf16 %v584, %v582
        %v590 = vpack.c.bf16 %v585, %v583
        %v591 = vld [vmem:[#allocation2] sm:$0x1]
        %593 = vset.pattern.permute.xlu0 0
        %594 = vperm.xlu0 %593, %v591
        %v595 = vpop.permute.xlu0 %594
        %v597 = vlaneseq
        %v598 = vshrl.u32 %v597, 7
        %v599 = vsub.s32 0, %v598
        %v600 = vrot.slane %v595, %v599
        %v602 = vsel %vm494, %v586, 0
        %604 = vmatprep.subr.bf16.mxu0 0
        %605 = vmatpush1.bf16.msra.mxu0 0
        %606 = vmatprep.subr.bf16.mxu0 0
        %607 = vmatpush1.bf16.msra.mxu0 0
        %608 = vmatprep.subr.bf16.mxu0 0
        %609 = vmatpush1.bf16.msra.mxu0 0
        %610 = vmatprep.subr.bf16.mxu0 0
        %611 = vmatpush1.bf16.msra.mxu0 0
        %612 = vmatprep.subr.bf16.mxu0 0
        %613 = vmatpush1.bf16.msra.mxu0 0
        %614 = vmatprep.subr.bf16.mxu0 0
        %615 = vmatpush1.bf16.msra.mxu0 0
        %616 = vmatprep.subr.bf16.mxu0 %v590
        %617 = vmatpush1.bf16.msra.mxu0 %v589
        %618 = vmatprep.subr.bf16.mxu0 %v588
        %619 = vmatpush1.bf16.msra.mxu0 %v587
        %620 = vmatprep.subr.bf16.mxu0 0
        %621 = vmatpush2.bf16.msra.mxu0 0
        %622 = vmatprep.subr.bf16.mxu0 0
        %623 = vmatpush2.bf16.msra.mxu0 0
        %624 = vmatprep.subr.bf16.mxu0 0
        %625 = vmatpush2.bf16.msra.mxu0 0
        %626 = vmatprep.subr.bf16.mxu0 0
        %627 = vmatpush2.bf16.msra.mxu0 0
        %628 = vmatprep.subr.bf16.mxu0 0
        %629 = vmatpush2.bf16.msra.mxu0 0
        %630 = vmatprep.subr.bf16.mxu0 0
        %631 = vmatpush2.bf16.msra.mxu0 0
        %632 = vmatprep.subr.bf16.mxu0 0
        %633 = vmatpush2.bf16.msra.mxu0 0
        %634 = vmatprep.subr.bf16.mxu0 0
        %635 = vmatpush2.bf16.msra.mxu0 0
        %636 = vmatprep.mubr.bf16.mxu0 0
        %637 = vmatmul.mubr.bf16.gmra.mxu0 %v602
        %v638 = vpop.f32.mrf.mxu0
        %v639 = vadd.f32 %v600, %v638
        %v640 = vpop.f32.mrf.mxu0
        %v641 = vadd.f32 %v600, %v640
        %v642 = vpop.f32.mrf.mxu0
        %v643 = vpop.f32.mrf.mxu0
        %644 = vdwg.mxu0
        %v647 = vcombine.low %v639, %v641
        %v649 = vunpack.c.l.s4 1966171168
        %v650 = vunpack.c.0.s8 %v649
        %v651 = vlaneseq
        %v652 = vshrl.u32 %v651, 7
        %v653 = vsub.s32 %v650, %v652
        %v654 = vrot.slane %v647, %v653
        %v656 = vunpack.c.l.s4 1966171168
        %v657 = vunpack.c.0.s8 %v656
        %v658 = vlaneseq
        %v659 = vshrl.u32 %v658, 7
        %v660 = vsub.s32 %v657, %v659
        %v661 = vrot.slane %v654, %v660
        %v663 = vlaneseq
        %vm664 = vcmp.ge.s32.totalorder %v663, 0
        %vm665 = vcmp.lt.s32.totalorder %v663, 256
        %vm666 = vmand %vm664, %vm665
        %667 = vst.msk [vmem:[%s298] sm:$0x3] %vm666, %v661
        %s668 = sand.u32 %s199, 1
        %s669 = scalar_lea.sflag [#allocation4], %s668
        %s670 = sand.u32 %s199, 1
        %s671 = smul.addr %s670, 2
        %s672 = scalar_lea.vmem [#allocation3], %s671
        // Predicated region
        $region49: #{tpu_custom_call.1} parent=47 // pred_check
          %p673 = pneg %p209
        $region50: #{tpu_custom_call.1} parent=47 // pred_check_branch
          %675 = sbr.rel (%p673) target = $region52
        $region51: #{tpu_custom_call.1} parent=47 // pred_region
          %s676 = smul.u32 2, %s28
          %s678 = ssub.s32 32, 32
          %679 = vsyncadd %s669, %s678
          %s680 = smul.addr %s27, 2
          %s681 = sadd.s32 %s676, %s680
          %s682 = smul.addr %s681, 16
          %s683 = scalar_lea.hbm %s7, %s682
          %s685 = sshll.u32 %s672, 4
          %s686 = int_to_ptr.vmem [resolvable:$true] %s685
          %688 = dma.vmem_to_hbm [thread:$0]  %s686, 32, %s683, %s669
        $region52: #{tpu_custom_call.1} parent=47 // pred_fallthru
          _
      $region48: #{tpu_custom_call.1} parent=5 // pred_fallthru
        _
      %p689 = scmp.le.s32.totalorder 2, %s18
      // Predicated region
      $region53: #{tpu_custom_call.1} parent=5 // pred_check
        %p690 = pneg %p689
      $region54: #{tpu_custom_call.1} parent=5 // pred_check_branch
        %692 = sbr.rel (%p690) target = $region56
      $region55: #{tpu_custom_call.1} parent=5 // pred_region
        %s693 = ssub.s32 %s18, 2
        // Predicated region
        $region57: #{tpu_custom_call.1} parent=55 // pred_check
          %p694 = pneg %p215
        $region58: #{tpu_custom_call.1} parent=55 // pred_check_branch
          %696 = sbr.rel (%p694) target = $region60
        $region59: #{tpu_custom_call.1} parent=55 // pred_region
          %s697 = sand.u32 %s200, 1
          %s698 = scalar_lea.sflag [#allocation4], %s697
          %s699 = sand.u32 %s200, 1
          %s700 = smul.addr %s699, 2
          %s701 = scalar_lea.vmem [#allocation3], %s700
          %702 = dma.done %s698, 32
        $region60: #{tpu_custom_call.1} parent=55 // pred_fallthru
          _
      $region56: #{tpu_custom_call.1} parent=5 // pred_fallthru
        _
    $region6: #{tpu_custom_call.1} parent=1 // loop_footer
      %s22 = sadd.s32 1, %s18
    $region7: #{tpu_custom_call.1} parent=1 // loop_footer_branch
      %17 = sbr.rel target = $region3
    $region8: #{tpu_custom_call.1} parent=1 // loop_exit
      _
    %703 = vsyncpa [#allocation4], 1
    %s704 = scalar_lea.sflag [#allocation4], 1
    %705 = vsyncpa %s704, 1

</llo_original>
